<compile_context>
chip_gen: v7x
topology: tpu7x:2x2x1
jax: 0.10.0
libtpu: 0.0.40
codegen_flags: <defaults>
</compile_context>

<pallas_src>
import math

import jax
import jax.numpy as jnp
from jax.experimental import pallas as pl
from jax.experimental.pallas import tpu as pltpu


# ----------------------------------------------------------------------------- kernels

def _sigmoid(x):
    return 1.0 / (1.0 + jnp.exp(-x))          # exp -> EUP slot


def _gru_update(x_ref, h_ref, wih_ref, whh_ref, bih_ref, bhh_ref):
    """PyTorch GRUCell math (gate order r, z, n), f32 accumulation, lane-dense gates."""
    x = x_ref[...].astype(jnp.float32)         # (TB, in_dim)
    h = h_ref[...].astype(jnp.float32)         # (TB, H)
    H = h_ref.shape[-1]
    gi = jnp.dot(x, wih_ref[...].astype(jnp.float32),
                 preferred_element_type=jnp.float32) + bih_ref[...].astype(jnp.float32)
    gh = jnp.dot(h, whh_ref[...].astype(jnp.float32),
                 preferred_element_type=jnp.float32) + bhh_ref[...].astype(jnp.float32)
    r = _sigmoid(gi[:, :H] + gh[:, :H])
    z = _sigmoid(gi[:, H:2 * H] + gh[:, H:2 * H])
    n = jnp.tanh(gi[:, 2 * H:] + r * gh[:, 2 * H:])
    return (1.0 - z) * n + z * h


def _gru_cell_kernel(x_ref, h_ref, wih_ref, whh_ref, bih_ref, bhh_ref, hout_ref):
    hout_ref[...] = _gru_update(x_ref, h_ref, wih_ref, whh_ref,
                                bih_ref, bhh_ref).astype(hout_ref.dtype)


def _gru_cell_linear_kernel(x_ref, h_ref, wih_ref, whh_ref, bih_ref, bhh_ref,
                            wlin_ref, blin_ref, out_ref, hout_ref):
    h_new = _gru_update(x_ref, h_ref, wih_ref, whh_ref, bih_ref, bhh_ref)
    hout_ref[...] = h_new.astype(hout_ref.dtype)
    y = jnp.dot(h_new, wlin_ref[...].astype(jnp.float32),
                preferred_element_type=jnp.float32) + blin_ref[...].astype(jnp.float32)
    out_ref[...] = y.astype(out_ref.dtype)


# ----------------------------------------------------------------------------- wrappers

_VMEM_LIMIT = 32 * 1024 * 1024   # safe on v5e/v6e/v7x (raises v5e's 16 MiB default scoped)


def _gru_step(x, h, w_ih_t, w_hh_t, b_ih, b_hh, w_lin_t=None, b_lin=None):
    """One GRUCell step; if w_lin_t is given, also applies the Linear head (fused)."""
    B, in_dim = x.shape
    H = h.shape[1]
    TB = B if B <= 256 else 256              # batch tile (sublane axis)
    grid = (pl.cdiv(B, TB),)
    row = lambda i: (i, 0)                   # batch-tiled operands
    bcast = lambda i: (0, 0)                 # broadcast (weight/bias) operands

    in_specs = [
        pl.BlockSpec((TB, in_dim), row),
        pl.BlockSpec((TB, H), row),
        pl.BlockSpec((in_dim, 3 * H), bcast),
        pl.BlockSpec((H, 3 * H), bcast),
        pl.BlockSpec((1, 3 * H), bcast),
        pl.BlockSpec((1, 3 * H), bcast),
    ]
    cparams = pltpu.CompilerParams(
        dimension_semantics=("parallel",),
        vmem_limit_bytes=_VMEM_LIMIT,
    )

    if w_lin_t is None:
        return pl.pallas_call(
            _gru_cell_kernel,
            out_shape=jax.ShapeDtypeStruct((B, H), h.dtype),
            grid=grid,
            in_specs=in_specs,
            out_specs=pl.BlockSpec((TB, H), row),
            compiler_params=cparams,
        )(x, h, w_ih_t, w_hh_t, b_ih, b_hh)

    out_dim = w_lin_t.shape[1]
    in_specs = in_specs + [
        pl.BlockSpec((H, out_dim), bcast),
        pl.BlockSpec((1, out_dim), bcast),
    ]
    out, h_new = pl.pallas_call(
        _gru_cell_linear_kernel,
        out_shape=(jax.ShapeDtypeStruct((B, out_dim), x.dtype),
                   jax.ShapeDtypeStruct((B, H), h.dtype)),
        grid=grid,
        in_specs=in_specs,
        out_specs=(pl.BlockSpec((TB, out_dim), row),
                   pl.BlockSpec((TB, H), row)),
        compiler_params=cparams,
    )(x, h, w_ih_t, w_hh_t, b_ih, b_hh, w_lin_t, b_lin)
    return out, h_new


class Recurrent_Cell:
    """JAX/Pallas port of the PyTorch Recurrent_Cell (GRUCell stack + Linear head).

    Functional on the hidden state: __call__(x, hidden) -> (out, new_hidden)
    instead of mutating self.hidden in place (same forward math per step).
    """

    def __init__(self, in_dim, out_dim, hidden_dim=128, n_layer=1, mod='GRU', *, key):
        if mod != 'GRU':
            # TODO(synk): LSTMCell / RNNCell variants not implemented in Pallas yet.
            raise NotImplementedError("only mod='GRU' is implemented")
        self.in_dim, self.out_dim = in_dim, out_dim
        self.hidden_dim, self.n_layer, self.mod = hidden_dim, n_layer, mod

        keys = jax.random.split(key, 4 * n_layer + 2)
        k = 1.0 / math.sqrt(hidden_dim)
        u = lambda kk, shape, bound: jax.random.uniform(
            kk, shape, jnp.float32, minval=-bound, maxval=bound)

        # Per-layer params, stored pre-transposed so kernel matmuls are lane-dense.
        self.layers = []
        for i in range(n_layer):
            d_in = in_dim if i == 0 else hidden_dim
            kw = keys[4 * i: 4 * i + 4]
            w_ih_t = u(kw[0], (3 * hidden_dim, d_in), k).T          # (d_in, 3H)
            w_hh_t = u(kw[1], (3 * hidden_dim, hidden_dim), k).T    # (H, 3H)
            b_ih = u(kw[2], (1, 3 * hidden_dim), k)
            b_hh = u(kw[3], (1, 3 * hidden_dim), k)
            self.layers.append((w_ih_t, w_hh_t, b_ih, b_hh))

        self.w_lin_t = u(keys[-2], (out_dim, hidden_dim), k).T       # (H, out_dim)
        self.b_lin = u(keys[-1], (1, out_dim), k)

    def init_hidden(self, batch_size, dtype=jnp.float32):
        return [jnp.zeros((batch_size, self.hidden_dim), dtype)
                for _ in range(self.n_layer)]

    def __call__(self, x, hidden):
        h = x
        new_hidden = []
        out = None
        for i, (w_ih_t, w_hh_t, b_ih, b_hh) in enumerate(self.layers):
            if i == self.n_layer - 1:
                out, h_new = _gru_step(h, hidden[i], w_ih_t, w_hh_t, b_ih, b_hh,
                                       self.w_lin_t, self.b_lin)
            else:
                h_new = _gru_step(h, hidden[i], w_ih_t, w_hh_t, b_ih, b_hh)
            new_hidden.append(h_new)
            h = h_new
        return out, new_hidden


# ----------------------------------------------------------------------------- reference

def _gru_cell_ref(x, h, w_ih_t, w_hh_t, b_ih, b_hh):
    hp = lambda a, b: jnp.dot(a, b, precision=jax.lax.Precision.HIGHEST)
    H = h.shape[1]
    gi = hp(x, w_ih_t) + b_ih
    gh = hp(h, w_hh_t) + b_hh
    r = jax.nn.sigmoid(gi[:, :H] + gh[:, :H])
    z = jax.nn.sigmoid(gi[:, H:2 * H] + gh[:, H:2 * H])
    n = jnp.tanh(gi[:, 2 * H:] + r * gh[:, 2 * H:])
    return (1.0 - z) * n + z * h


def _reference_forward(cell, x, hidden):
    h = x
    new_hidden = []
    for (w_ih_t, w_hh_t, b_ih, b_hh), hi in zip(cell.layers, hidden):
        hi_new = _gru_cell_ref(h, hi, w_ih_t, w_hh_t, b_ih, b_hh)
        new_hidden.append(hi_new)
        h = hi_new
    out = jnp.dot(h, cell.w_lin_t, precision=jax.lax.Precision.HIGHEST) + cell.b_lin
    return out, new_hidden


# ----------------------------------------------------------------------------- test glue

if __name__ == "__main__":
    key = jax.random.PRNGKey(0)
    kparam, kx1, kx2 = jax.random.split(key, 3)

    B, in_dim, hidden_dim, out_dim, n_layer = 2, 32, 128, 64, 2
    cell = Recurrent_Cell(in_dim, out_dim, hidden_dim=hidden_dim,
                          n_layer=n_layer, mod='GRU', key=kparam)

    x1 = jax.random.normal(kx1, (B, in_dim), jnp.float32)
    x2 = jax.random.normal(kx2, (B, in_dim), jnp.float32)
    hidden0 = cell.init_hidden(B)

    # Step 1 (zero hidden) and step 2 (carried hidden) — exercises the recurrence.
    out1, hidden1 = cell(x1, hidden0)
    out2, hidden2 = cell(x2, hidden1)
    jax.block_until_ready((out1, out2))

    assert out1.shape == (B, out_dim) and out2.shape == (B, out_dim)
    assert all(h.shape == (B, hidden_dim) for h in hidden2)

    ref1, rh1 = _reference_forward(cell, x1, hidden0)
    ref2, rh2 = _reference_forward(cell, x2, rh1)
    assert jnp.allclose(out1, ref1, atol=1e-3, rtol=1e-3), "step-1 output mismatch"
    assert jnp.allclose(out2, ref2, atol=1e-3, rtol=1e-3), "step-2 output mismatch"
    for a, b in zip(hidden2, rh2):
        assert jnp.allclose(a, b, atol=1e-3, rtol=1e-3), "hidden state mismatch"

    print("KERNEL_OK")
</pallas_src>

<mosaic_0001>
module attributes {stable_mosaic.version = 11 : i64} {
  func.func @_gru_cell_kernel(%arg0: i32, %arg1: memref<2x32xf32, #tpu.memory_space<vmem>>, %arg2: memref<2x128xf32, #tpu.memory_space<vmem>>, %arg3: memref<32x384xf32, #tpu.memory_space<vmem>>, %arg4: memref<128x384xf32, #tpu.memory_space<vmem>>, %arg5: memref<1x384xf32, #tpu.memory_space<vmem>>, %arg6: memref<1x384xf32, #tpu.memory_space<vmem>>, %arg7: memref<2x128xf32, #tpu.memory_space<vmem>>) attributes {dimension_semantics = [#tpu.dimension_semantics<parallel>], iteration_bounds = array<i64: 1>, scalar_prefetch = 0 : i64, scratch_operands = 0 : i64, tpu.core_type = #tpu.core_type<tc>, window_params = [{transform_indices = @transform_0, window_bounds = array<i64: 2, 32>}, {transform_indices = @transform_1, window_bounds = array<i64: 2, 128>}, {pipeline_mode = #tpu.pipeline_mode<synchronous>, transform_indices = @transform_2, window_bounds = array<i64: 32, 384>}, {pipeline_mode = #tpu.pipeline_mode<synchronous>, transform_indices = @transform_3, window_bounds = array<i64: 128, 384>}, {pipeline_mode = #tpu.pipeline_mode<synchronous>, transform_indices = @transform_4, window_bounds = array<i64: 1, 384>}, {pipeline_mode = #tpu.pipeline_mode<synchronous>, transform_indices = @transform_5, window_bounds = array<i64: 1, 384>}, {transform_indices = @transform_6, window_bounds = array<i64: 2, 128>}]} {
    %c0 = arith.constant 0 : index
    %c0_0 = arith.constant 0 : index
    %0 = vector.load %arg1[%c0, %c0_0] : memref<2x32xf32, #tpu.memory_space<vmem>>, vector<2x32xf32>
    %c0_1 = arith.constant 0 : index
    %c0_2 = arith.constant 0 : index
    %1 = vector.load %arg2[%c0_1, %c0_2] : memref<2x128xf32, #tpu.memory_space<vmem>>, vector<2x128xf32>
    %c0_3 = arith.constant 0 : index
    %c0_4 = arith.constant 0 : index
    %2 = vector.load %arg3[%c0_3, %c0_4] : memref<32x384xf32, #tpu.memory_space<vmem>>, vector<32x384xf32>
    %cst = arith.constant dense<0.000000e+00> : vector<2x384xf32>
    %3 = tpu.matmul %0, %2, %cst {dimension_numbers = #tpu.dot_dimension_numbers<[1], [0], [0], [1], [0, 0, 1, 1], [], []>} : vector<2x32xf32>, vector<32x384xf32>, vector<2x384xf32> -> vector<2x384xf32>
    %c0_5 = arith.constant 0 : index
    %c0_6 = arith.constant 0 : index
    %4 = vector.load %arg5[%c0_5, %c0_6] : memref<1x384xf32, #tpu.memory_space<vmem>>, vector<1x384xf32>
    %5 = vector.broadcast %4 : vector<1x384xf32> to vector<2x384xf32>
    %6 = arith.addf %3, %5 : vector<2x384xf32>
    %c0_7 = arith.constant 0 : index
    %c0_8 = arith.constant 0 : index
    %7 = vector.load %arg4[%c0_7, %c0_8] : memref<128x384xf32, #tpu.memory_space<vmem>>, vector<128x384xf32>
    %cst_9 = arith.constant dense<0.000000e+00> : vector<2x384xf32>
    %8 = tpu.matmul %1, %7, %cst_9 {dimension_numbers = #tpu.dot_dimension_numbers<[1], [0], [0], [1], [0, 0, 1, 1], [], []>} : vector<2x128xf32>, vector<128x384xf32>, vector<2x384xf32> -> vector<2x384xf32>
    %c0_10 = arith.constant 0 : index
    %c0_11 = arith.constant 0 : index
    %9 = vector.load %arg6[%c0_10, %c0_11] : memref<1x384xf32, #tpu.memory_space<vmem>>, vector<1x384xf32>
    %10 = vector.broadcast %9 : vector<1x384xf32> to vector<2x384xf32>
    %11 = arith.addf %8, %10 : vector<2x384xf32>
    %12 = vector.extract_strided_slice %6 {offsets = [0, 0], sizes = [2, 128], strides = [1, 1]} : vector<2x384xf32> to vector<2x128xf32>
    %13 = vector.extract_strided_slice %11 {offsets = [0, 0], sizes = [2, 128], strides = [1, 1]} : vector<2x384xf32> to vector<2x128xf32>
    %14 = arith.addf %12, %13 : vector<2x128xf32>
    %cst_12 = arith.constant 0.000000e+00 : f32
    %15 = vector.broadcast %cst_12 : f32 to vector<2x128xf32>
    %16 = arith.subf %15, %14 : vector<2x128xf32>
    %17 = math.exp %16 : vector<2x128xf32>
    %cst_13 = arith.constant 1.000000e+00 : f32
    %18 = vector.broadcast %cst_13 : f32 to vector<2x128xf32>
    %19 = arith.addf %18, %17 : vector<2x128xf32>
    %cst_14 = arith.constant 1.000000e+00 : f32
    %20 = vector.broadcast %cst_14 : f32 to vector<2x128xf32>
    %21 = arith.divf %20, %19 : vector<2x128xf32>
    %22 = vector.extract_strided_slice %6 {offsets = [0, 128], sizes = [2, 128], strides = [1, 1]} : vector<2x384xf32> to vector<2x128xf32>
    %23 = vector.extract_strided_slice %11 {offsets = [0, 128], sizes = [2, 128], strides = [1, 1]} : vector<2x384xf32> to vector<2x128xf32>
    %24 = arith.addf %22, %23 : vector<2x128xf32>
    %cst_15 = arith.constant 0.000000e+00 : f32
    %25 = vector.broadcast %cst_15 : f32 to vector<2x128xf32>
    %26 = arith.subf %25, %24 : vector<2x128xf32>
    %27 = math.exp %26 : vector<2x128xf32>
    %cst_16 = arith.constant 1.000000e+00 : f32
    %28 = vector.broadcast %cst_16 : f32 to vector<2x128xf32>
    %29 = arith.addf %28, %27 : vector<2x128xf32>
    %cst_17 = arith.constant 1.000000e+00 : f32
    %30 = vector.broadcast %cst_17 : f32 to vector<2x128xf32>
    %31 = arith.divf %30, %29 : vector<2x128xf32>
    %32 = vector.extract_strided_slice %6 {offsets = [0, 256], sizes = [2, 128], strides = [1, 1]} : vector<2x384xf32> to vector<2x128xf32>
    %33 = vector.extract_strided_slice %11 {offsets = [0, 256], sizes = [2, 128], strides = [1, 1]} : vector<2x384xf32> to vector<2x128xf32>
    %34 = arith.mulf %21, %33 : vector<2x128xf32>
    %35 = arith.addf %32, %34 : vector<2x128xf32>
    %36 = math.tanh %35 : vector<2x128xf32>
    %cst_18 = arith.constant 1.000000e+00 : f32
    %37 = vector.broadcast %cst_18 : f32 to vector<2x128xf32>
    %38 = arith.subf %37, %31 : vector<2x128xf32>
    %39 = arith.mulf %38, %36 : vector<2x128xf32>
    %40 = arith.mulf %31, %1 : vector<2x128xf32>
    %41 = arith.addf %39, %40 : vector<2x128xf32>
    %c0_19 = arith.constant 0 : index
    %c0_20 = arith.constant 0 : index
    %42 = vector.load %arg7[%c0_19, %c0_20] : memref<2x128xf32, #tpu.memory_space<vmem>>, vector<2x128xf32>
    tpu.vector_store %arg7[%c0_19, %c0_20], %41 {strides = array<i32>} : memref<2x128xf32, #tpu.memory_space<vmem>>, vector<2x128xf32>,
    return
  }
  func.func @transform_0(%arg0: i32) -> (i32, i32) {
    %c0_i32 = arith.constant 0 : i32
    %c0_i32_0 = arith.constant 0 : i32
    return %arg0, %c0_i32 : i32, i32
  }
  func.func @transform_1(%arg0: i32) -> (i32, i32) {
    %c0_i32 = arith.constant 0 : i32
    %c0_i32_0 = arith.constant 0 : i32
    return %arg0, %c0_i32 : i32, i32
  }
  func.func @transform_2(%arg0: i32) -> (i32, i32) {
    %c0_i32 = arith.constant 0 : i32
    %c0_i32_0 = arith.constant 0 : i32
    %c0_i32_1 = arith.constant 0 : i32
    return %c0_i32, %c0_i32_0 : i32, i32
  }
  func.func @transform_3(%arg0: i32) -> (i32, i32) {
    %c0_i32 = arith.constant 0 : i32
    %c0_i32_0 = arith.constant 0 : i32
    %c0_i32_1 = arith.constant 0 : i32
    return %c0_i32, %c0_i32_0 : i32, i32
  }
  func.func @transform_4(%arg0: i32) -> (i32, i32) {
    %c0_i32 = arith.constant 0 : i32
    %c0_i32_0 = arith.constant 0 : i32
    %c0_i32_1 = arith.constant 0 : i32
    return %c0_i32, %c0_i32_0 : i32, i32
  }
  func.func @transform_5(%arg0: i32) -> (i32, i32) {
    %c0_i32 = arith.constant 0 : i32
    %c0_i32_0 = arith.constant 0 : i32
    %c0_i32_1 = arith.constant 0 : i32
    return %c0_i32, %c0_i32_0 : i32, i32
  }
  func.func @transform_6(%arg0: i32) -> (i32, i32) {
    %c0_i32 = arith.constant 0 : i32
    %c0_i32_0 = arith.constant 0 : i32
    return %arg0, %c0_i32 : i32, i32
  }
}

</mosaic_0001>

<llo_original>
// kernel: tpu_custom_call.1
$region0: #{tpu_custom_call.1}
  #allocation0 [shape = 'u32[]', space=smem, size = 0x4, offset = 0x4, fixed_abs, tag = 'smem constant byte address 0x4 - core index']
  #allocation1 [shape = 'u32[144,128]{1,0:T(1,128)}', space=vmem, size = 0x12000, scoped, tag = 'internal scratch']
  %s0 = inlined_call_operand.hbm [shape: f32[2,32], index: 0, kind: input, shape index: {}]
  %s1 = inlined_call_operand.hbm [shape: f32[2,128], index: 1, kind: input, shape index: {}]
  %s2 = inlined_call_operand.hbm [shape: f32[32,384], index: 2, kind: input, shape index: {}]
  %s3 = inlined_call_operand.hbm [shape: f32[128,384], index: 3, kind: input, shape index: {}]
  %s4 = inlined_call_operand.vmem [shape: f32[1,384], index: 4, kind: input, shape index: {}]
  %s5 = inlined_call_operand.vmem [shape: f32[1,384], index: 5, kind: input, shape index: {}]
  %s6 = inlined_call_operand.hbm [shape: f32[2,128], index: 6, kind: output, shape index: {}]
  %s7 = sld [smem:[#allocation0]]
  $region50: #{tpu_custom_call.1} parent=0
    _
  %s9 = ssub.s32 1, %s7
  %s10 = scalar_select 0, %s9, %s7
  $region1: #{tpu_custom_call.1} parent=0
    #allocation2 [shape = 'u8[1024]{0}', space=vmem, size = 0x400, scoped, tag = 'input window, operand 0, single buffered']
    #allocation3 [shape = 's32[1]{0}', space=sflag, size = 0x4, scoped, tag = 'scoped memory for tpu_custom_call.1']
    #allocation4 [shape = 's32[1]{0}', space=sflag, size = 0x4, scoped, tag = 'scoped memory for tpu_custom_call.1']
    #allocation5 [shape = 'u8[1024]{0}', space=vmem, size = 0x400, scoped, tag = 'input window, operand 1, single buffered']
    #allocation6 [shape = 's32[1]{0}', space=sflag, size = 0x4, scoped, tag = 'scoped memory for tpu_custom_call.1']
    #allocation7 [shape = 'u8[49152]{0}', space=vmem, size = 0xc000, scoped, tag = 'input window, operand 2, single buffered']
    #allocation8 [shape = 'u8[196608]{0}', space=vmem, size = 0x30000, scoped, tag = 'input window, operand 3, single buffered']
    #allocation9 [shape = 's32[1]{0}', space=sflag, size = 0x4, scoped, tag = 'scoped memory for tpu_custom_call.1']
    #allocation10 [shape = 'u8[1024]{0}', space=vmem, size = 0x400, scoped, tag = 'output window, operand 0, single buffered']
    %11 = vsyncpa [#allocation3], 0
    %12 = vsyncpa [#allocation6], 0
    %13 = vsyncpa [#allocation9], 0
    %14 = vsyncpa [#allocation4], 0
    // Predicated region
    $region2: #{tpu_custom_call.1} parent=1 // pred_check
      _
    $region3: #{tpu_custom_call.1} parent=1 // pred_check_branch
      %16 = sbr.rel (0) target = $region5
    $region4: #{tpu_custom_call.1} parent=1 // pred_region
      %s18 = ssub.s32 32, 32
      %19 = vsyncadd [#allocation3], %s18
      %s21 = sshll.u32 [#allocation2], 4
      %s22 = int_to_ptr.vmem [resolvable:$true] %s21
      %24 = dma.hbm_to_vmem [thread:$0]  %s0, 32, %s22, [#allocation3]
    $region5: #{tpu_custom_call.1} parent=1 // pred_fallthru
      _
    // Predicated region
    $region6: #{tpu_custom_call.1} parent=1 // pred_check
      _
    $region7: #{tpu_custom_call.1} parent=1 // pred_check_branch
      %26 = sbr.rel (0) target = $region9
    $region8: #{tpu_custom_call.1} parent=1 // pred_region
      %s28 = ssub.s32 32, 32
      %29 = vsyncadd [#allocation6], %s28
      %s31 = sshll.u32 [#allocation5], 4
      %s32 = int_to_ptr.vmem [resolvable:$true] %s31
      %34 = dma.hbm_to_vmem [thread:$0]  %s1, 32, %s32, [#allocation6]
    $region9: #{tpu_custom_call.1} parent=1 // pred_fallthru
      _
    // Predicated region
    $region10: #{tpu_custom_call.1} parent=1 // pred_check
      _
    $region11: #{tpu_custom_call.1} parent=1 // pred_check_branch
      %36 = sbr.rel (0) target = $region13
    $region12: #{tpu_custom_call.1} parent=1 // pred_region
      %s38 = ssub.s32 1536, 1536
      %39 = vsyncadd [#allocation6], %s38
      %s40 = sshll.u32 [#allocation7], 4
      %s41 = int_to_ptr.vmem [resolvable:$true] %s40
      %46 = dma.hbm_to_vmem [thread:$0]  %s2, 1536, %s41, [#allocation6], 384, 384, 24
    $region13: #{tpu_custom_call.1} parent=1 // pred_fallthru
      _
    // Predicated region
    $region14: #{tpu_custom_call.1} parent=1 // pred_check
      _
    $region15: #{tpu_custom_call.1} parent=1 // pred_check_branch
      %48 = sbr.rel (0) target = $region17
    $region16: #{tpu_custom_call.1} parent=1 // pred_region
      %s50 = ssub.s32 6144, 6144
      %51 = vsyncadd [#allocation9], %s50
      %s52 = sshll.u32 [#allocation8], 4
      %s53 = int_to_ptr.vmem [resolvable:$true] %s52
      %58 = dma.hbm_to_vmem [thread:$0]  %s3, 6144, %s53, [#allocation9], 384, 384, 24
    $region17: #{tpu_custom_call.1} parent=1 // pred_fallthru
      _
    // Predicated region
    $region18: #{tpu_custom_call.1} parent=1 // pred_check
      _
    $region19: #{tpu_custom_call.1} parent=1 // pred_check_branch
      %60 = sbr.rel (0) target = $region21
    $region20: #{tpu_custom_call.1} parent=1 // pred_region
      _
    $region21: #{tpu_custom_call.1} parent=1 // pred_fallthru
      _
    // Predicated region
    $region22: #{tpu_custom_call.1} parent=1 // pred_check
      _
    $region23: #{tpu_custom_call.1} parent=1 // pred_check_branch
      %62 = sbr.rel (0) target = $region25
    $region24: #{tpu_custom_call.1} parent=1 // pred_region
      _
    $region25: #{tpu_custom_call.1} parent=1 // pred_fallthru
      _
    // Predicated region
    $region26: #{tpu_custom_call.1} parent=1 // pred_check
      _
    $region27: #{tpu_custom_call.1} parent=1 // pred_check_branch
      %64 = sbr.rel (0) target = $region29
    $region28: #{tpu_custom_call.1} parent=1 // pred_region
      %65 = dma.done [#allocation3], 32
    $region29: #{tpu_custom_call.1} parent=1 // pred_fallthru
      _
    // Predicated region
    $region30: #{tpu_custom_call.1} parent=1 // pred_check
      _
    $region31: #{tpu_custom_call.1} parent=1 // pred_check_branch
      %67 = sbr.rel (0) target = $region33
    $region32: #{tpu_custom_call.1} parent=1 // pred_region
      %68 = dma.done [#allocation6], 32
    $region33: #{tpu_custom_call.1} parent=1 // pred_fallthru
      _
    // Predicated region
    $region34: #{tpu_custom_call.1} parent=1 // pred_check
      _
    $region35: #{tpu_custom_call.1} parent=1 // pred_check_branch
      %70 = sbr.rel (0) target = $region37
    $region36: #{tpu_custom_call.1} parent=1 // pred_region
      %71 = dma.done [#allocation6], 1536
    $region37: #{tpu_custom_call.1} parent=1 // pred_fallthru
      _
    // Predicated region
    $region38: #{tpu_custom_call.1} parent=1 // pred_check
      _
    $region39: #{tpu_custom_call.1} parent=1 // pred_check_branch
      %73 = sbr.rel (0) target = $region41
    $region40: #{tpu_custom_call.1} parent=1 // pred_region
      %74 = dma.done [#allocation9], 6144
    $region41: #{tpu_custom_call.1} parent=1 // pred_fallthru
      _
    %v75 = vld [vmem:[#allocation2] sm:$0x3]
    %v76 = vld [vmem:[#allocation5] sm:$0x3]
    %v77 = vld [vmem:[#allocation7] sm:$0xff]
    %v78 = vld [vmem:[#allocation7 + $0x8] sm:$0xff]
    %v79 = vld [vmem:[#allocation7 + $0x10] sm:$0xff]
    %v80 = vld [vmem:[#allocation7 + $0x18] sm:$0xff]
    %v81 = vld [vmem:[#allocation7 + $0x20] sm:$0xff]
    %v82 = vld [vmem:[#allocation7 + $0x28] sm:$0xff]
    %v83 = vld [vmem:[#allocation7 + $0x30] sm:$0xff]
    %v84 = vld [vmem:[#allocation7 + $0x38] sm:$0xff]
    %v85 = vld [vmem:[#allocation7 + $0x40] sm:$0xff]
    %v86 = vld [vmem:[#allocation7 + $0x48] sm:$0xff]
    %v87 = vld [vmem:[#allocation7 + $0x50] sm:$0xff]
    %v88 = vld [vmem:[#allocation7 + $0x58] sm:$0xff]
    %v89 = vld [vmem:[%s4] sm:$0x7]
    %v91 = vlaneseq
    %v92 = vshrl.u32 %v91, 7
    %v93 = vsub.s32 0, %v92
    %v94 = vrot.slane %v89, %v93
    %v95 = vlaneseq
    %v96 = vshrl.u32 %v95, 7
    %v97 = vsub.s32 1, %v96
    %v98 = vrot.slane %v89, %v97
    %v99 = vlaneseq
    %v100 = vshrl.u32 %v99, 7
    %v101 = vsub.s32 2, %v100
    %v102 = vrot.slane %v89, %v101
    %vm106 = vcmask 261120
    %v108 = vsel %vm106, %v75, 0
    %110 = vmatprep.subr.mxu0 %v78
    %111 = vmatpush1.msra.mxu0 %v77
    %112 = vmatprep.subr.mxu0 %v81
    %113 = vmatpush1.msra.mxu0 %v80
    %114 = vmatprep.subr.mxu0 %v84
    %115 = vmatpush1.msra.mxu0 %v83
    %116 = vmatprep.subr.mxu0 %v87
    %117 = vmatpush1.msra.mxu0 %v86
    %118 = vmatprep.subr.mxu0 0.0
    %119 = vmatpush1.msra.mxu0 0.0
    %120 = vmatprep.subr.mxu0 0.0
    %121 = vmatpush1.msra.mxu0 0.0
    %122 = vmatprep.subr.mxu0 0.0
    %123 = vmatpush1.msra.mxu0 0.0
    %124 = vmatprep.subr.mxu0 0.0
    %125 = vmatpush1.msra.mxu0 0.0
    %126 = vmatprep.subr.mxu0 0.0
    %127 = vmatpush1.msra.mxu0 0.0
    %128 = vmatprep.subr.mxu0 0.0
    %129 = vmatpush1.msra.mxu0 0.0
    %130 = vmatprep.subr.mxu0 0.0
    %131 = vmatpush1.msra.mxu0 0.0
    %132 = vmatprep.subr.mxu0 0.0
    %133 = vmatpush1.msra.mxu0 0.0
    %134 = vmatprep.subr.mxu0 0.0
    %135 = vmatpush1.msra.mxu0 0.0
    %136 = vmatprep.subr.mxu0 0.0
    %137 = vmatpush1.msra.mxu0 0.0
    %138 = vmatprep.subr.mxu0 0.0
    %139 = vmatpush1.msra.mxu0 0.0
    %140 = vmatprep.subr.mxu0 0.0
    %141 = vmatpush1.msra.mxu0 0.0
    %142 = vmatprep.subr.mxu0 0.0
    %143 = vmatpush1.msra.mxu0 0.0
    %144 = vmatprep.subr.mxu0 0.0
    %145 = vmatpush1.msra.mxu0 0.0
    %146 = vmatprep.subr.mxu0 0.0
    %147 = vmatpush1.msra.mxu0 0.0
    %148 = vmatprep.subr.mxu0 0.0
    %149 = vmatpush1.msra.mxu0 0.0
    %150 = vmatprep.subr.mxu0 0.0
    %151 = vmatpush1.msra.mxu0 0.0
    %152 = vmatprep.subr.mxu0 0.0
    %153 = vmatpush1.msra.mxu0 0.0
    %154 = vmatprep.subr.mxu0 0.0
    %155 = vmatpush1.msra.mxu0 0.0
    %156 = vmatprep.subr.mxu0 0.0
    %157 = vmatpush1.msra.mxu0 0.0
    %158 = vmatprep.subr.mxu0 0.0
    %159 = vmatpush1.msra.mxu0 0.0
    %160 = vmatprep.subr.mxu0 0.0
    %161 = vmatpush1.msra.mxu0 0.0
    %162 = vmatprep.subr.mxu0 0.0
    %163 = vmatpush1.msra.mxu0 0.0
    %164 = vmatprep.subr.mxu0 0.0
    %165 = vmatpush1.msra.mxu0 0.0
    %166 = vmatprep.subr.mxu0 0.0
    %167 = vmatpush1.msra.mxu0 0.0
    %168 = vmatprep.subr.mxu0 0.0
    %169 = vmatpush1.msra.mxu0 0.0
    %170 = vmatprep.subr.mxu0 0.0
    %171 = vmatpush1.msra.mxu0 0.0
    %172 = vmatprep.subr.mxu0 0.0
    %173 = vmatpush1.msra.mxu0 0.0
    %174 = vmatprep.mubr.f32.mxu0 0.0
    %175 = vmatmul.mubr.f32.gmra.mrb[0].mxu0 %v108
    %v176 = vpop.f32.mrb[0].mxu0
    %v177 = vadd.f32 %v94, %v176
    %v178 = vpop.f32.mrb[0].mxu0
    %v179 = vadd.f32 %v98, %v178
    %180 = vdwg.mxu0
    %181 = vmatprep.subr.mxu0 0.0
    %182 = vmatpush1.msra.mxu0 %v79
    %183 = vmatprep.subr.mxu0 0.0
    %184 = vmatpush1.msra.mxu0 %v82
    %185 = vmatprep.subr.mxu0 0.0
    %186 = vmatpush1.msra.mxu0 %v85
    %187 = vmatprep.subr.mxu0 0.0
    %188 = vmatpush1.msra.mxu0 %v88
    %189 = vmatprep.subr.mxu0 0.0
    %190 = vmatpush1.msra.mxu0 0.0
    %191 = vmatprep.subr.mxu0 0.0
    %192 = vmatpush1.msra.mxu0 0.0
    %193 = vmatprep.subr.mxu0 0.0
    %194 = vmatpush1.msra.mxu0 0.0
    %195 = vmatprep.subr.mxu0 0.0
    %196 = vmatpush1.msra.mxu0 0.0
    %197 = vmatprep.subr.mxu0 0.0
    %198 = vmatpush1.msra.mxu0 0.0
    %199 = vmatprep.subr.mxu0 0.0
    %200 = vmatpush1.msra.mxu0 0.0
    %201 = vmatprep.subr.mxu0 0.0
    %202 = vmatpush1.msra.mxu0 0.0
    %203 = vmatprep.subr.mxu0 0.0
    %204 = vmatpush1.msra.mxu0 0.0
    %205 = vmatprep.subr.mxu0 0.0
    %206 = vmatpush1.msra.mxu0 0.0
    %207 = vmatprep.subr.mxu0 0.0
    %208 = vmatpush1.msra.mxu0 0.0
    %209 = vmatprep.subr.mxu0 0.0
    %210 = vmatpush1.msra.mxu0 0.0
    %211 = vmatprep.subr.mxu0 0.0
    %212 = vmatpush1.msra.mxu0 0.0
    %213 = vmatprep.subr.mxu0 0.0
    %214 = vmatpush1.msra.mxu0 0.0
    %215 = vmatprep.subr.mxu0 0.0
    %216 = vmatpush1.msra.mxu0 0.0
    %217 = vmatprep.subr.mxu0 0.0
    %218 = vmatpush1.msra.mxu0 0.0
    %219 = vmatprep.subr.mxu0 0.0
    %220 = vmatpush1.msra.mxu0 0.0
    %221 = vmatprep.subr.mxu0 0.0
    %222 = vmatpush1.msra.mxu0 0.0
    %223 = vmatprep.subr.mxu0 0.0
    %224 = vmatpush1.msra.mxu0 0.0
    %225 = vmatprep.subr.mxu0 0.0
    %226 = vmatpush1.msra.mxu0 0.0
    %227 = vmatprep.subr.mxu0 0.0
    %228 = vmatpush1.msra.mxu0 0.0
    %229 = vmatprep.subr.mxu0 0.0
    %230 = vmatpush1.msra.mxu0 0.0
    %231 = vmatprep.subr.mxu0 0.0
    %232 = vmatpush1.msra.mxu0 0.0
    %233 = vmatprep.subr.mxu0 0.0
    %234 = vmatpush1.msra.mxu0 0.0
    %235 = vmatprep.subr.mxu0 0.0
    %236 = vmatpush1.msra.mxu0 0.0
    %237 = vmatprep.subr.mxu0 0.0
    %238 = vmatpush1.msra.mxu0 0.0
    %239 = vmatprep.subr.mxu0 0.0
    %240 = vmatpush1.msra.mxu0 0.0
    %241 = vmatprep.subr.mxu0 0.0
    %242 = vmatpush1.msra.mxu0 0.0
    %243 = vmatprep.subr.mxu0 0.0
    %244 = vmatpush1.msra.mxu0 0.0
    %245 = vmatprep.mubr.f32.mxu0 0.0
    %246 = vmatmul.mubr.f32.gmra.mrb[0].mxu0 %v108
    %v247 = vpop.f32.mrb[0].mxu0
    %v248 = vadd.f32 %v102, %v247
    %v249 = vpop.f32.mrb[0].mxu0
    %250 = vdwg.mxu0
    %v251 = vld [vmem:[#allocation8] sm:$0xff]
    %v252 = vld [vmem:[#allocation8 + $0x8] sm:$0xff]
    %v253 = vld [vmem:[#allocation8 + $0x10] sm:$0xff]
    %v254 = vld [vmem:[#allocation8 + $0x18] sm:$0xff]
    %v255 = vld [vmem:[#allocation8 + $0x20] sm:$0xff]
    %v256 = vld [vmem:[#allocation8 + $0x28] sm:$0xff]
    %v257 = vld [vmem:[#allocation8 + $0x30] sm:$0xff]
    %v258 = vld [vmem:[#allocation8 + $0x38] sm:$0xff]
    %v259 = vld [vmem:[#allocation8 + $0x40] sm:$0xff]
    %v260 = vld [vmem:[#allocation8 + $0x48] sm:$0xff]
    %v261 = vld [vmem:[#allocation8 + $0x50] sm:$0xff]
    %v262 = vld [vmem:[#allocation8 + $0x58] sm:$0xff]
    %v263 = vld [vmem:[#allocation8 + $0x60] sm:$0xff]
    %v264 = vld [vmem:[#allocation8 + $0x68] sm:$0xff]
    %v265 = vld [vmem:[#allocation8 + $0x70] sm:$0xff]
    %v266 = vld [vmem:[#allocation8 + $0x78] sm:$0xff]
    %v267 = vld [vmem:[#allocation8 + $0x80] sm:$0xff]
    %v268 = vld [vmem:[#allocation8 + $0x88] sm:$0xff]
    %v269 = vld [vmem:[#allocation8 + $0x90] sm:$0xff]
    %v270 = vld [vmem:[#allocation8 + $0x98] sm:$0xff]
    %v271 = vld [vmem:[#allocation8 + $0xa0] sm:$0xff]
    %v272 = vld [vmem:[#allocation8 + $0xa8] sm:$0xff]
    %v273 = vld [vmem:[#allocation8 + $0xb0] sm:$0xff]
    %v274 = vld [vmem:[#allocation8 + $0xb8] sm:$0xff]
    %v275 = vld [vmem:[#allocation8 + $0xc0] sm:$0xff]
    %v276 = vld [vmem:[#allocation8 + $0xc8] sm:$0xff]
    %v277 = vld [vmem:[#allocation8 + $0xd0] sm:$0xff]
    %v278 = vld [vmem:[#allocation8 + $0xd8] sm:$0xff]
    %v279 = vld [vmem:[#allocation8 + $0xe0] sm:$0xff]
    %v280 = vld [vmem:[#allocation8 + $0xe8] sm:$0xff]
    %v281 = vld [vmem:[#allocation8 + $0xf0] sm:$0xff]
    %v282 = vld [vmem:[#allocation8 + $0xf8] sm:$0xff]
    %v283 = vld [vmem:[#allocation8 + $0x100] sm:$0xff]
    %v284 = vld [vmem:[#allocation8 + $0x108] sm:$0xff]
    %v285 = vld [vmem:[#allocation8 + $0x110] sm:$0xff]
    %v286 = vld [vmem:[#allocation8 + $0x118] sm:$0xff]
    %v287 = vld [vmem:[#allocation8 + $0x120] sm:$0xff]
    %v288 = vld [vmem:[#allocation8 + $0x128] sm:$0xff]
    %v289 = vld [vmem:[#allocation8 + $0x130] sm:$0xff]
    %v290 = vld [vmem:[#allocation8 + $0x138] sm:$0xff]
    %v291 = vld [vmem:[#allocation8 + $0x140] sm:$0xff]
    %v292 = vld [vmem:[#allocation8 + $0x148] sm:$0xff]
    %v293 = vld [vmem:[#allocation8 + $0x150] sm:$0xff]
    %v294 = vld [vmem:[#allocation8 + $0x158] sm:$0xff]
    %v295 = vld [vmem:[#allocation8 + $0x160] sm:$0xff]
    %v296 = vld [vmem:[#allocation8 + $0x168] sm:$0xff]
    %v297 = vld [vmem:[#allocation8 + $0x170] sm:$0xff]
    %v298 = vld [vmem:[#allocation8 + $0x178] sm:$0xff]
    %v299 = vld [vmem:[%s5] sm:$0x7]
    %v301 = vlaneseq
    %v302 = vshrl.u32 %v301, 7
    %v303 = vsub.s32 0, %v302
    %v304 = vrot.slane %v299, %v303
    %v305 = vlaneseq
    %v306 = vshrl.u32 %v305, 7
    %v307 = vsub.s32 1, %v306
    %v308 = vrot.slane %v299, %v307
    %v309 = vlaneseq
    %v310 = vshrl.u32 %v309, 7
    %v311 = vsub.s32 2, %v310
    %v312 = vrot.slane %v299, %v311
    %316 = vmatprep.subr.mxu0 %v252
    %317 = vmatpush1.msra.mxu0 %v251
    %318 = vmatprep.subr.mxu0 %v255
    %319 = vmatpush1.msra.mxu0 %v254
    %320 = vmatprep.subr.mxu0 %v258
    %321 = vmatpush1.msra.mxu0 %v257
    %322 = vmatprep.subr.mxu0 %v261
    %323 = vmatpush1.msra.mxu0 %v260
    %324 = vmatprep.subr.mxu0 %v264
    %325 = vmatpush1.msra.mxu0 %v263
    %326 = vmatprep.subr.mxu0 %v267
    %327 = vmatpush1.msra.mxu0 %v266
    %328 = vmatprep.subr.mxu0 %v270
    %329 = vmatpush1.msra.mxu0 %v269
    %330 = vmatprep.subr.mxu0 %v273
    %331 = vmatpush1.msra.mxu0 %v272
    %332 = vmatprep.subr.mxu0 %v276
    %333 = vmatpush1.msra.mxu0 %v275
    %334 = vmatprep.subr.mxu0 %v279
    %335 = vmatpush1.msra.mxu0 %v278
    %336 = vmatprep.subr.mxu0 %v282
    %337 = vmatpush1.msra.mxu0 %v281
    %338 = vmatprep.subr.mxu0 %v285
    %339 = vmatpush1.msra.mxu0 %v284
    %340 = vmatprep.subr.mxu0 %v288
    %341 = vmatpush1.msra.mxu0 %v287
    %342 = vmatprep.subr.mxu0 %v291
    %343 = vmatpush1.msra.mxu0 %v290
    %344 = vmatprep.subr.mxu0 %v294
    %345 = vmatpush1.msra.mxu0 %v293
    %346 = vmatprep.subr.mxu0 %v297
    %347 = vmatpush1.msra.mxu0 %v296
    %348 = vmatprep.subr.mxu0 0.0
    %349 = vmatpush1.msra.mxu0 0.0
    %350 = vmatprep.subr.mxu0 0.0
    %351 = vmatpush1.msra.mxu0 0.0
    %352 = vmatprep.subr.mxu0 0.0
    %353 = vmatpush1.msra.mxu0 0.0
    %354 = vmatprep.subr.mxu0 0.0
    %355 = vmatpush1.msra.mxu0 0.0
    %356 = vmatprep.subr.mxu0 0.0
    %357 = vmatpush1.msra.mxu0 0.0
    %358 = vmatprep.subr.mxu0 0.0
    %359 = vmatpush1.msra.mxu0 0.0
    %360 = vmatprep.subr.mxu0 0.0
    %361 = vmatpush1.msra.mxu0 0.0
    %362 = vmatprep.subr.mxu0 0.0
    %363 = vmatpush1.msra.mxu0 0.0
    %364 = vmatprep.subr.mxu0 0.0
    %365 = vmatpush1.msra.mxu0 0.0
    %366 = vmatprep.subr.mxu0 0.0
    %367 = vmatpush1.msra.mxu0 0.0
    %368 = vmatprep.subr.mxu0 0.0
    %369 = vmatpush1.msra.mxu0 0.0
    %370 = vmatprep.subr.mxu0 0.0
    %371 = vmatpush1.msra.mxu0 0.0
    %372 = vmatprep.subr.mxu0 0.0
    %373 = vmatpush1.msra.mxu0 0.0
    %374 = vmatprep.subr.mxu0 0.0
    %375 = vmatpush1.msra.mxu0 0.0
    %376 = vmatprep.subr.mxu0 0.0
    %377 = vmatpush1.msra.mxu0 0.0
    %378 = vmatprep.subr.mxu0 0.0
    %379 = vmatpush1.msra.mxu0 0.0
    %380 = vmatprep.mubr.f32.mxu0 0.0
    %381 = vmatmul.mubr.f32.gmra.mrb[0].mxu0 %v76
    %v382 = vpop.f32.mrb[0].mxu0
    %v383 = vadd.f32 %v304, %v382
    %v384 = vpop.f32.mrb[0].mxu0
    %v385 = vadd.f32 %v308, %v384
    %386 = vdwg.mxu0
    %387 = vmatprep.subr.mxu0 0.0
    %388 = vmatpush1.msra.mxu0 %v253
    %389 = vmatprep.subr.mxu0 0.0
    %390 = vmatpush1.msra.mxu0 %v256
    %391 = vmatprep.subr.mxu0 0.0
    %392 = vmatpush1.msra.mxu0 %v259
    %393 = vmatprep.subr.mxu0 0.0
    %394 = vmatpush1.msra.mxu0 %v262
    %395 = vmatprep.subr.mxu0 0.0
    %396 = vmatpush1.msra.mxu0 %v265
    %397 = vmatprep.subr.mxu0 0.0
    %398 = vmatpush1.msra.mxu0 %v268
    %399 = vmatprep.subr.mxu0 0.0
    %400 = vmatpush1.msra.mxu0 %v271
    %401 = vmatprep.subr.mxu0 0.0
    %402 = vmatpush1.msra.mxu0 %v274
    %403 = vmatprep.subr.mxu0 0.0
    %404 = vmatpush1.msra.mxu0 %v277
    %405 = vmatprep.subr.mxu0 0.0
    %406 = vmatpush1.msra.mxu0 %v280
    %407 = vmatprep.subr.mxu0 0.0
    %408 = vmatpush1.msra.mxu0 %v283
    %409 = vmatprep.subr.mxu0 0.0
    %410 = vmatpush1.msra.mxu0 %v286
    %411 = vmatprep.subr.mxu0 0.0
    %412 = vmatpush1.msra.mxu0 %v289
    %413 = vmatprep.subr.mxu0 0.0
    %414 = vmatpush1.msra.mxu0 %v292
    %415 = vmatprep.subr.mxu0 0.0
    %416 = vmatpush1.msra.mxu0 %v295
    %417 = vmatprep.subr.mxu0 0.0
    %418 = vmatpush1.msra.mxu0 %v298
    %419 = vmatprep.subr.mxu0 0.0
    %420 = vmatpush1.msra.mxu0 0.0
    %421 = vmatprep.subr.mxu0 0.0
    %422 = vmatpush1.msra.mxu0 0.0
    %423 = vmatprep.subr.mxu0 0.0
    %424 = vmatpush1.msra.mxu0 0.0
    %425 = vmatprep.subr.mxu0 0.0
    %426 = vmatpush1.msra.mxu0 0.0
    %427 = vmatprep.subr.mxu0 0.0
    %428 = vmatpush1.msra.mxu0 0.0
    %429 = vmatprep.subr.mxu0 0.0
    %430 = vmatpush1.msra.mxu0 0.0
    %431 = vmatprep.subr.mxu0 0.0
    %432 = vmatpush1.msra.mxu0 0.0
    %433 = vmatprep.subr.mxu0 0.0
    %434 = vmatpush1.msra.mxu0 0.0
    %435 = vmatprep.subr.mxu0 0.0
    %436 = vmatpush1.msra.mxu0 0.0
    %437 = vmatprep.subr.mxu0 0.0
    %438 = vmatpush1.msra.mxu0 0.0
    %439 = vmatprep.subr.mxu0 0.0
    %440 = vmatpush1.msra.mxu0 0.0
    %441 = vmatprep.subr.mxu0 0.0
    %442 = vmatpush1.msra.mxu0 0.0
    %443 = vmatprep.subr.mxu0 0.0
    %444 = vmatpush1.msra.mxu0 0.0
    %445 = vmatprep.subr.mxu0 0.0
    %446 = vmatpush1.msra.mxu0 0.0
    %447 = vmatprep.subr.mxu0 0.0
    %448 = vmatpush1.msra.mxu0 0.0
    %449 = vmatprep.subr.mxu0 0.0
    %450 = vmatpush1.msra.mxu0 0.0
    %451 = vmatprep.mubr.f32.mxu0 0.0
    %452 = vmatmul.mubr.f32.gmra.mrb[0].mxu0 %v76
    %v453 = vpop.f32.mrb[0].mxu0
    %v454 = vadd.f32 %v312, %v453
    %v455 = vpop.f32.mrb[0].mxu0
    %456 = vdwg.mxu0
    %v457 = vadd.f32 %v177, %v383
    %v458 = vsub.f32 0.0, %v457
    %v459 = vmul.f32 %v458, 1.442695
    %v460 = vpow.pop %v459
    %v461 = vadd.f32 %v460, 1.0
    %v462 = vrcp.pop %v461
    %v463 = vmul.f32 1.0, %v462
    %v464 = vadd.f32 %v179, %v385
    %v465 = vsub.f32 0.0, %v464
    %v466 = vmul.f32 %v465, 1.442695
    %v467 = vpow.pop %v466
    %v468 = vadd.f32 %v467, 1.0
    %v469 = vrcp.pop %v468
    %v470 = vmul.f32 1.0, %v469
    %v471 = vmul.f32 %v463, %v454
    %v472 = vadd.f32 %v248, %v471
    %v473 = vtanh.pop %v472
    %v474 = vsub.f32 1.0, %v470
    %v475 = vmul.f32 %v474, %v473
    %v476 = vmul.f32 %v470, %v76
    %v477 = vadd.f32 %v475, %v476
    %478 = vst [vmem:[#allocation10] sm:$0x3] %v477
    // Predicated region
    $region42: #{tpu_custom_call.1} parent=1 // pred_check
      _
    $region43: #{tpu_custom_call.1} parent=1 // pred_check_branch
      %480 = sbr.rel (0) target = $region45
    $region44: #{tpu_custom_call.1} parent=1 // pred_region
      %s482 = ssub.s32 32, 32
      %483 = vsyncadd [#allocation4], %s482
      %s485 = sshll.u32 [#allocation10], 4
      %s486 = int_to_ptr.vmem [resolvable:$true] %s485
      %488 = dma.vmem_to_hbm [thread:$0]  %s486, 32, %s6, [#allocation4]
    $region45: #{tpu_custom_call.1} parent=1 // pred_fallthru
      _
    // Predicated region
    $region46: #{tpu_custom_call.1} parent=1 // pred_check
      _
    $region47: #{tpu_custom_call.1} parent=1 // pred_check_branch
      %490 = sbr.rel (0) target = $region49
    $region48: #{tpu_custom_call.1} parent=1 // pred_region
      %491 = dma.done [#allocation4], 32
    $region49: #{tpu_custom_call.1} parent=1 // pred_fallthru
      _
    %492 = vsyncpa [#allocation3], 1
    %493 = vsyncpa [#allocation6], 1
    %494 = vsyncpa [#allocation9], 1
    %495 = vsyncpa [#allocation4], 1

</llo_original>
